<compile_context>
chip_gen: v6e
topology: v6e:2x2x1
jax: 0.10.0
libtpu: 0.0.40
codegen_flags: <defaults>
</compile_context>

<pallas_src>
import functools

import jax
import jax.numpy as jnp
from jax.experimental import pallas as pl
from jax.experimental.pallas import tpu as pltpu


def _linreg_kernel(ab_ref, x_ref, o_ref):
    # ab_ref: SMEM (2,) f32 scalars [a, b]; x_ref / o_ref: VMEM tiles.
    a = ab_ref[0]
    b = ab_ref[1]
    xv = x_ref[...].astype(jnp.float32)
    # One fused VPU mul-add per element; VPU is nowhere near the bottleneck.
    o_ref[...] = (a + b * xv).astype(o_ref.dtype)


def _round_up(v, m):
    return ((v + m - 1) // m) * m


def _sublane_multiple(dtype):
    # Sublane packing multiple: 8 rows for 32-bit, 16 for 16-bit, 32 for 8-bit.
    s = int(jnp.dtype(dtype).itemsize)
    return max(8, 32 // max(1, min(4, s)))


@functools.cache
def _vmem_capacity_bytes():
    try:
        return int(pltpu.get_tpu_info().vmem_capacity_bytes)
    except Exception:
        return 64 << 20  # conservative fallback (v7x per-TC VMEM)


def linear_regression_forward(x, a, b):
    """out = a + b * x, elementwise, with f32 parameters (PyTorch promotion)."""
    orig_shape = x.shape
    in_dtype = x.dtype
    out_dtype = jnp.result_type(jnp.float32, in_dtype)  # f32 params promote like torch
    total = int(x.size)

    if total == 0:
        return jnp.zeros(orig_shape, out_dtype)

    in_isz = int(jnp.dtype(in_dtype).itemsize)
    out_isz = int(jnp.dtype(out_dtype).itemsize)

    # Parameters stay f32, stacked into one SMEM scalar vector.
    ab = jnp.stack([
        jnp.asarray(a, jnp.float32).reshape(()),
        jnp.asarray(b, jnp.float32).reshape(()),
    ])  # (2,) f32

    # ---- Lane-dense (rows, L) view; pad only when total % 128 != 0 --------
    flat = x.reshape(-1)
    if total % 128 == 0:
        padded_total = total
    else:
        padded_total = _round_up(total, 128)          # tiny unavoidable pad
        flat = jnp.pad(flat, (0, padded_total - total))
    L = 128
    for cand in (1024, 512, 256, 128):
        if padded_total % cand == 0:
            L = cand
            break
    rows = padded_total // L
    x2 = flat.reshape(rows, L)

    # ---- Generation-aware tile sizing -------------------------------------
    vmem_cap = _vmem_capacity_bytes()
    # ~16 MiB input tiles on 128 MiB parts (v5e/v6e), ~8 MiB on 64 MiB v7x.
    target_tile_bytes = (16 << 20) if vmem_cap >= (96 << 20) else (8 << 20)

    sub = max(_sublane_multiple(in_dtype), _sublane_multiple(out_dtype))
    big_isz = max(in_isz, out_isz)
    target_rows = max(sub, (target_tile_bytes // (L * big_isz)) // sub * sub)

    if rows <= sub:
        block_rows = rows  # full-dim block; single step only for tiny inputs
    else:
        # Guarantee >= 2 grid steps so the "parallel" axis can shard across
        # v7x's two TensorCores and pipelining overlaps DMA with compute.
        half_rows = _round_up((rows + 1) // 2, sub)
        block_rows = max(sub, min(target_rows, half_rows))
        # Prefer a block_rows that divides rows so the last block is full.
        cand = block_rows
        while cand >= max(sub, block_rows // 2):
            if rows % cand == 0:
                block_rows = cand
                break
            cand -= sub

    grid = (pl.cdiv(rows, block_rows),)

    # Double-buffered input + output tiles (+50% headroom), capped at 75% VMEM.
    needed = 2 * block_rows * L * (in_isz + out_isz)
    vmem_limit = int(min(vmem_cap * 3 // 4,
                         max(32 << 20, needed + needed // 2 + (2 << 20))))

    cost = pl.CostEstimate(
        flops=2 * total,
        transcendentals=0,
        bytes_accessed=total * (in_isz + out_isz),
    )

    out2 = pl.pallas_call(
        _linreg_kernel,
        out_shape=jax.ShapeDtypeStruct((rows, L), out_dtype),
        grid=grid,
        in_specs=[
            pl.BlockSpec(memory_space=pltpu.SMEM),            # [a, b] scalars
            pl.BlockSpec((block_rows, L), lambda i: (i, 0)),  # x tile
        ],
        out_specs=pl.BlockSpec((block_rows, L), lambda i: (i, 0)),
        compiler_params=pltpu.CompilerParams(
            dimension_semantics=("parallel",),
            vmem_limit_bytes=vmem_limit,
        ),
        cost_estimate=cost,
    )(ab, x2)

    out = out2.reshape(-1)
    if padded_total != total:
        out = out[:total]
    return out.reshape(orig_shape)


if __name__ == "__main__":
    key = jax.random.PRNGKey(0)
    kx, ka, kb = jax.random.split(key, 3)

    # Deterministic "randn"-style parameter init (matches nn.Parameter(torch.randn(1))).
    a = jax.random.normal(ka, (1,), dtype=jnp.float32)
    b = jax.random.normal(kb, (1,), dtype=jnp.float32)

    # Small input consistent with the module's forward (elementwise, any shape).
    x = jax.random.normal(kx, (2, 4, 16, 16), dtype=jnp.float32)

    out = linear_regression_forward(x, a, b)
    out = jax.block_until_ready(out)

    # Verify against plain-JAX reference of the PyTorch forward.
    ref = a[0] + b[0] * x
    assert out.shape == x.shape
    assert out.dtype == ref.dtype
    assert jnp.allclose(out, ref, atol=1e-6, rtol=1e-6)

    print("KERNEL_OK")
</pallas_src>

<mosaic_0001>
module attributes {stable_mosaic.version = 11 : i64} {
  func.func @_linreg_kernel(%arg0: i32, %arg1: memref<2xf32, #tpu.memory_space<smem>>, %arg2: memref<2x1024xf32, #tpu.memory_space<vmem>>, %arg3: memref<2x1024xf32, #tpu.memory_space<vmem>>) attributes {dimension_semantics = [#tpu.dimension_semantics<parallel>], iteration_bounds = array<i64: 1>, scalar_prefetch = 0 : i64, scratch_operands = 0 : i64, tpu.core_type = #tpu.core_type<tc>, window_params = [{transform_indices = @transform_0, window_bounds = array<i64: 2>}, {transform_indices = @transform_1, window_bounds = array<i64: 2, 1024>}, {transform_indices = @transform_2, window_bounds = array<i64: 2, 1024>}]} {
    %c0 = arith.constant 0 : index
    %0 = memref.load %arg1[%c0] : memref<2xf32, #tpu.memory_space<smem>>
    %c1 = arith.constant 1 : index
    %1 = memref.load %arg1[%c1] : memref<2xf32, #tpu.memory_space<smem>>
    %c0_0 = arith.constant 0 : index
    %c0_1 = arith.constant 0 : index
    %2 = vector.load %arg2[%c0_0, %c0_1] : memref<2x1024xf32, #tpu.memory_space<vmem>>, vector<2x1024xf32>
    %3 = vector.broadcast %1 : f32 to vector<2x1024xf32>
    %4 = arith.mulf %3, %2 : vector<2x1024xf32>
    %5 = vector.broadcast %0 : f32 to vector<2x1024xf32>
    %6 = arith.addf %5, %4 : vector<2x1024xf32>
    %c0_2 = arith.constant 0 : index
    %c0_3 = arith.constant 0 : index
    %7 = vector.load %arg3[%c0_2, %c0_3] : memref<2x1024xf32, #tpu.memory_space<vmem>>, vector<2x1024xf32>
    tpu.vector_store %arg3[%c0_2, %c0_3], %6 {strides = array<i32>} : memref<2x1024xf32, #tpu.memory_space<vmem>>, vector<2x1024xf32>,
    return
  }
  func.func @transform_0(%arg0: i32) -> i32 {
    %c0_i32 = arith.constant 0 : i32
    %c0_i32_0 = arith.constant 0 : i32
    return %c0_i32 : i32
  }
  func.func @transform_1(%arg0: i32) -> (i32, i32) {
    %c0_i32 = arith.constant 0 : i32
    %c0_i32_0 = arith.constant 0 : i32
    return %arg0, %c0_i32 : i32, i32
  }
  func.func @transform_2(%arg0: i32) -> (i32, i32) {
    %c0_i32 = arith.constant 0 : i32
    %c0_i32_0 = arith.constant 0 : i32
    return %arg0, %c0_i32 : i32, i32
  }
}

</mosaic_0001>

<llo_original>
// kernel: tpu_custom_call.1
$region0: #{tpu_custom_call.1}
  #allocation0 [shape = 'u32[]', space=smem, size = 0x4, offset = 0x4, fixed_abs, tag = 'smem constant byte address 0x4 - core index']
  #allocation1 [shape = 'u32[144,128]{1,0:T(1,128)}', space=vmem, size = 0x12000, scoped, tag = 'internal scratch']
  %s0 = inlined_call_operand.hbm [shape: f32[2], index: 0, kind: input, shape index: {}]
  %s1 = inlined_call_operand.hbm [shape: f32[2,1024], index: 1, kind: input, shape index: {}]
  %s2 = inlined_call_operand.hbm [shape: f32[2,1024], index: 2, kind: output, shape index: {}]
  %s3 = sld [smem:[#allocation0]]
  $region26: #{tpu_custom_call.1} parent=0
    _
  %s5 = ssub.s32 1, %s3
  %s6 = scalar_select 0, %s5, %s3
  $region1: #{tpu_custom_call.1} parent=0
    #allocation2 [shape = 'u8[512]{0}', space=smem, size = 0x200, scoped, tag = 'input window, operand 0, single buffered']
    #allocation3 [shape = 's32[1]{0}', space=sflag, size = 0x4, scoped, tag = 'scoped memory for tpu_custom_call.1']
    #allocation4 [shape = 's32[1]{0}', space=sflag, size = 0x4, scoped, tag = 'scoped memory for tpu_custom_call.1']
    #allocation5 [shape = 's32[1]{0}', space=sflag, size = 0x4, scoped, tag = 'scoped memory for tpu_custom_call.1']
    #allocation6 [shape = 'u8[8192]{0}', space=vmem, size = 0x2000, scoped, tag = 'input window, operand 1, single buffered']
    #allocation7 [shape = 'u8[8192]{0}', space=vmem, size = 0x2000, scoped, tag = 'output window, operand 0, single buffered']
    %7 = vsyncpa [#allocation5], 0
    %8 = vsyncpa [#allocation3], 0
    %9 = vsyncpa [#allocation4], 0
    // Predicated region
    $region2: #{tpu_custom_call.1} parent=1 // pred_check
      _
    $region3: #{tpu_custom_call.1} parent=1 // pred_check_branch
      %11 = sbr.rel (0) target = $region5
    $region4: #{tpu_custom_call.1} parent=1 // pred_region
      %s13 = ssub.s32 16, 16
      %14 = vsyncadd [#allocation5], %s13
      %17 = dma.hbm_to_smem %s0, 16, [#allocation2], [#allocation5]
    $region5: #{tpu_custom_call.1} parent=1 // pred_fallthru
      _
    // Predicated region
    $region6: #{tpu_custom_call.1} parent=1 // pred_check
      _
    $region7: #{tpu_custom_call.1} parent=1 // pred_check_branch
      %19 = sbr.rel (0) target = $region9
    $region8: #{tpu_custom_call.1} parent=1 // pred_region
      %s21 = ssub.s32 256, 256
      %22 = vsyncadd [#allocation3], %s21
      %s24 = sshll.u32 [#allocation6], 4
      %s25 = int_to_ptr.vmem [resolvable:$true] %s24
      %27 = dma.hbm_to_vmem [thread:$0]  %s1, 256, %s25, [#allocation3]
    $region9: #{tpu_custom_call.1} parent=1 // pred_fallthru
      _
    // Predicated region
    $region10: #{tpu_custom_call.1} parent=1 // pred_check
      _
    $region11: #{tpu_custom_call.1} parent=1 // pred_check_branch
      %29 = sbr.rel (0) target = $region13
    $region12: #{tpu_custom_call.1} parent=1 // pred_region
      %30 = dma.done [#allocation5], 16
    $region13: #{tpu_custom_call.1} parent=1 // pred_fallthru
      _
    // Predicated region
    $region14: #{tpu_custom_call.1} parent=1 // pred_check
      _
    $region15: #{tpu_custom_call.1} parent=1 // pred_check_branch
      %32 = sbr.rel (0) target = $region17
    $region16: #{tpu_custom_call.1} parent=1 // pred_region
      %33 = dma.done [#allocation3], 256
    $region17: #{tpu_custom_call.1} parent=1 // pred_fallthru
      _
    %34 = sfence
    %s35 = sld [smem:[#allocation2]]
    %s36 = sld [smem:[#allocation2 + $0x1]]
    %v37 = vld [vmem:[#allocation6] sm:$0xff]
    %v38 = vld [vmem:[#allocation6 + $0x8] sm:$0xff]
    %v39 = vstv %s36
    %v40 = vmul.f32 %v39, %v37
    %v41 = vmul.f32 %v39, %v38
    %v42 = vstv %s35
    %v43 = vadd.f32 %v42, %v40
    %v44 = vadd.f32 %v42, %v41
    %45 = vst [vmem:[#allocation7] sm:$0xff] %v43
    %46 = vst [vmem:[#allocation7 + $0x8] sm:$0xff] %v44
    // Predicated region
    $region18: #{tpu_custom_call.1} parent=1 // pred_check
      _
    $region19: #{tpu_custom_call.1} parent=1 // pred_check_branch
      %48 = sbr.rel (0) target = $region21
    $region20: #{tpu_custom_call.1} parent=1 // pred_region
      %s50 = ssub.s32 256, 256
      %51 = vsyncadd [#allocation4], %s50
      %s53 = sshll.u32 [#allocation7], 4
      %s54 = int_to_ptr.vmem [resolvable:$true] %s53
      %56 = dma.vmem_to_hbm [thread:$0]  %s54, 256, %s2, [#allocation4]
    $region21: #{tpu_custom_call.1} parent=1 // pred_fallthru
      _
    // Predicated region
    $region22: #{tpu_custom_call.1} parent=1 // pred_check
      _
    $region23: #{tpu_custom_call.1} parent=1 // pred_check_branch
      %58 = sbr.rel (0) target = $region25
    $region24: #{tpu_custom_call.1} parent=1 // pred_region
      %59 = dma.done [#allocation4], 256
    $region25: #{tpu_custom_call.1} parent=1 // pred_fallthru
      _
    %60 = vsyncpa [#allocation3], 1
    %61 = vsyncpa [#allocation4], 1
    %62 = vsyncpa [#allocation5], 1

</llo_original>
